<compile_context>
chip_gen: v5e
topology: v5e:2x2
jax: 0.10.0
libtpu: 0.0.40
codegen_flags: <defaults>
</compile_context>

<pallas_src>
import jax
import jax.numpy as jnp
from jax.experimental import pallas as pl
from jax.experimental.pallas import tpu as pltpu


def _conv_gemm_kernel(x_ref, w_ref, b_ref, o_ref):
    # x_ref: (K_pad, TM)   bf16 im2col columns for this (batch, row-tile)
    # w_ref: (Cout, K_pad) bf16 weights (resident: constant block index)
    # b_ref: (Cout, 1)     f32 bias
    # o_ref: (Cout, TM)    output tile, written in NCHW-flat layout
    acc = jnp.dot(w_ref[...], x_ref[...], preferred_element_type=jnp.float32)
    o_ref[...] = (acc + b_ref[...]).astype(o_ref.dtype)


def _cdiv(a, b):
    return -(-a // b)


def _pick_tile_m(m, cap=2048):
    """Row-tile (lane dim): multiple of 256, capped for VMEM.

    cap=2048 keeps the double-buffered f32 output tile (Cout=512) at ~8 MB,
    safely inside v7x's 32 MiB scoped-VMEM default (v5e/v6e have more).
    M is padded up to a multiple of the returned tile, so any H*W works.
    """
    n_steps = max(1, _cdiv(m, cap))
    t = _cdiv(_cdiv(m, n_steps), 256) * 256
    return max(256, min(t, cap))


def fcn_backbone_forward(x_nchw, weight_oihw, bias, *, tile_m=None,
                         compute_dtype=jnp.bfloat16):
    """Forward pass of FCNBackbone. Returns NCHW output, like the PyTorch module."""
    N, Cin, H, W = x_nchw.shape
    Cout = weight_oihw.shape[0]
    assert weight_oihw.shape == (Cout, Cin, 3, 3)
    assert Cout % 128 == 0  # lane-dense second-minor output dim (512 here)

    M = H * W
    K = 9 * Cin
    K_pad = _cdiv(K, 16) * 16           # bf16 sublane pack (16) friendly: 36 -> 48

    if tile_m is None:
        tile_m = _pick_tile_m(M)
    assert tile_m % 256 == 0
    M_pad = _cdiv(M, tile_m) * tile_m

    # ---- glue (plain JAX, fused under jit): im2col directly in NCHW order ----
    # x_cols[n, cin*9 + dy*3 + dx, h*W + w] = x_pad[n, cin, h+dy, w+dx]
    # -> the weight is a straight OIHW reshape, no transpose anywhere.
    x_c = x_nchw.astype(compute_dtype)
    x_p = jnp.pad(x_c, ((0, 0), (0, 0), (1, 1), (1, 1)))       # (N, Cin, H+2, W+2)
    patches = jnp.stack(
        [x_p[:, :, dy:dy + H, dx:dx + W] for dy in range(3) for dx in range(3)],
        axis=2)                                                  # (N, Cin, 9, H, W)
    x_cols = patches.reshape(N, K, M)
    x_cols = jnp.pad(x_cols, ((0, 0), (0, K_pad - K), (0, M_pad - M)))

    w_mat = weight_oihw.reshape(Cout, K).astype(compute_dtype)  # straight OIHW reshape
    w_mat = jnp.pad(w_mat, ((0, 0), (0, K_pad - K)))
    b_mat = bias.reshape(Cout, 1).astype(jnp.float32)

    grid = (N, M_pad // tile_m)

    # TODO(synk): if the downstream consumer tolerates bf16 activations, make
    # the out_shape dtype bf16 to halve output HBM writeback (biggest win on v5e).
    out_flat = pl.pallas_call(
        _conv_gemm_kernel,
        out_shape=jax.ShapeDtypeStruct((N, Cout, M_pad), x_nchw.dtype),
        grid_spec=pltpu.PrefetchScalarGridSpec(
            num_scalar_prefetch=0,
            grid=grid,
            in_specs=[
                pl.BlockSpec((pl.Squeezed(), K_pad, tile_m),
                             lambda n, m: (n, 0, m)),
                pl.BlockSpec((Cout, K_pad), lambda n, m: (0, 0)),   # resident
                pl.BlockSpec((Cout, 1), lambda n, m: (0, 0)),       # resident
            ],
            out_specs=pl.BlockSpec((pl.Squeezed(), Cout, tile_m),
                                   lambda n, m: (n, 0, m)),
        ),
        compiler_params=pltpu.CompilerParams(
            dimension_semantics=("parallel", "parallel"),
        ),
    )(x_cols, w_mat, b_mat)

    if M_pad != M:
        out_flat = out_flat[:, :, :M]
    return out_flat.reshape(N, Cout, H, W)                      # already NCHW


if __name__ == "__main__":
    # Small shapes consistent with the module: batch=2, num_features=4, 16x16.
    N, CIN, H, W = 2, 4, 16, 16
    COUT = 512  # fixed by FCNBackbone (out_channels = 512)

    key = jax.random.PRNGKey(0)
    kx, kw, kb = jax.random.split(key, 3)

    x = jax.random.normal(kx, (N, CIN, H, W), dtype=jnp.float32)
    fan_in = CIN * 3 * 3
    weight = jax.random.normal(kw, (COUT, CIN, 3, 3), dtype=jnp.float32) / jnp.sqrt(fan_in)
    bias = jax.random.normal(kb, (COUT,), dtype=jnp.float32) * 0.01

    fwd = jax.jit(fcn_backbone_forward)
    out = jax.block_until_ready(fwd(x, weight, bias))

    # Reference check against XLA's f32 conv (same NCHW/OIHW semantics as PyTorch).
    ref = jax.lax.conv_general_dilated(
        x, weight,
        window_strides=(1, 1),
        padding=((1, 1), (1, 1)),
        dimension_numbers=("NCHW", "OIHW", "NCHW"),
    ) + bias.reshape(1, COUT, 1, 1)

    assert out.shape == (N, COUT, H, W)
    # bf16 MXU inputs with f32 accumulation -> loosened tolerance vs f32 reference.
    assert jnp.allclose(out, ref, rtol=5e-2, atol=5e-2), "mismatch vs reference conv"

    print("KERNEL_OK")
</pallas_src>

<mosaic_0001>
module attributes {stable_mosaic.version = 11 : i64} {
  func.func @_conv_gemm_kernel(%arg0: i32, %arg1: i32, %arg2: memref<1x48x256xbf16, #tpu.memory_space<vmem>>, %arg3: memref<512x48xbf16, #tpu.memory_space<vmem>>, %arg4: memref<512x1xf32, #tpu.memory_space<vmem>>, %arg5: memref<1x512x256xf32, #tpu.memory_space<vmem>>) attributes {dimension_semantics = [#tpu.dimension_semantics<parallel>, #tpu.dimension_semantics<parallel>], iteration_bounds = array<i64: 2, 1>, scalar_prefetch = 0 : i64, scratch_operands = 0 : i64, tpu.core_type = #tpu.core_type<tc>, window_params = [{transform_indices = @transform_0, window_bounds = array<i64: 1, 48, 256>}, {pipeline_mode = #tpu.pipeline_mode<synchronous>, transform_indices = @transform_1, window_bounds = array<i64: 512, 48>}, {pipeline_mode = #tpu.pipeline_mode<synchronous>, transform_indices = @transform_2, window_bounds = array<i64: 512, 1>}, {transform_indices = @transform_3, window_bounds = array<i64: 1, 512, 256>}]} {
    %c0 = arith.constant 0 : index
    %c0_0 = arith.constant 0 : index
    %0 = vector.load %arg3[%c0, %c0_0] : memref<512x48xbf16, #tpu.memory_space<vmem>>, vector<512x48xbf16>
    %c0_1 = arith.constant 0 : index
    %c0_2 = arith.constant 0 : index
    %c0_3 = arith.constant 0 : index
    %1 = vector.load %arg2[%c0_1, %c0_2, %c0_3] : memref<1x48x256xbf16, #tpu.memory_space<vmem>>, vector<1x48x256xbf16>
    %2 = vector.shape_cast %1 : vector<1x48x256xbf16> to vector<48x256xbf16>
    %cst = arith.constant dense<0.000000e+00> : vector<512x256xf32>
    %3 = tpu.matmul %0, %2, %cst {dimension_numbers = #tpu.dot_dimension_numbers<[1], [0], [0], [1], [0, 0, 1, 1], [], []>} : vector<512x48xbf16>, vector<48x256xbf16>, vector<512x256xf32> -> vector<512x256xf32>
    %c0_4 = arith.constant 0 : index
    %c0_5 = arith.constant 0 : index
    %4 = vector.load %arg4[%c0_4, %c0_5] : memref<512x1xf32, #tpu.memory_space<vmem>>, vector<512x1xf32>
    %5 = vector.broadcast %4 : vector<512x1xf32> to vector<512x256xf32>
    %6 = arith.addf %3, %5 : vector<512x256xf32>
    %c0_6 = arith.constant 0 : index
    %c0_7 = arith.constant 0 : index
    %c0_8 = arith.constant 0 : index
    %7 = vector.load %arg5[%c0_6, %c0_7, %c0_8] : memref<1x512x256xf32, #tpu.memory_space<vmem>>, vector<1x512x256xf32>
    %8 = vector.shape_cast %7 : vector<1x512x256xf32> to vector<512x256xf32>
    %9 = vector.shape_cast %6 : vector<512x256xf32> to vector<1x512x256xf32>
    tpu.vector_store %arg5[%c0_6, %c0_7, %c0_8], %9 {strides = array<i32>} : memref<1x512x256xf32, #tpu.memory_space<vmem>>, vector<1x512x256xf32>,
    return
  }
  func.func @transform_0(%arg0: i32, %arg1: i32) -> (i32, i32, i32) {
    %c0_i32 = arith.constant 0 : i32
    %c0_i32_0 = arith.constant 0 : i32
    return %arg0, %c0_i32, %arg1 : i32, i32, i32
  }
  func.func @transform_1(%arg0: i32, %arg1: i32) -> (i32, i32) {
    %c0_i32 = arith.constant 0 : i32
    %c0_i32_0 = arith.constant 0 : i32
    %c0_i32_1 = arith.constant 0 : i32
    return %c0_i32, %c0_i32_0 : i32, i32
  }
  func.func @transform_2(%arg0: i32, %arg1: i32) -> (i32, i32) {
    %c0_i32 = arith.constant 0 : i32
    %c0_i32_0 = arith.constant 0 : i32
    %c0_i32_1 = arith.constant 0 : i32
    return %c0_i32, %c0_i32_0 : i32, i32
  }
  func.func @transform_3(%arg0: i32, %arg1: i32) -> (i32, i32, i32) {
    %c0_i32 = arith.constant 0 : i32
    %c0_i32_0 = arith.constant 0 : i32
    return %arg0, %c0_i32, %arg1 : i32, i32, i32
  }
}

</mosaic_0001>

<llo_original>
// kernel: fcn_backbone_forward.1
$region0: #{fcn_backbone_forward.1}
  #allocation0 [shape = 'u32[]', space=smem, size = 0x4, offset = 0x4, fixed_abs, tag = 'smem constant byte address 0x4 - core index']
  #allocation1 [shape = 'u32[72,128]{1,0:T(1,128)}', space=vmem, size = 0x9000, scoped, tag = 'internal scratch']
  %s0 = inlined_call_operand.vmem [shape: bf16[2,48,256], index: 0, kind: input, shape index: {}]
  %s1 = inlined_call_operand.vmem [shape: bf16[512,48], index: 1, kind: input, shape index: {}]
  %s2 = inlined_call_operand.vmem [shape: f32[512,1], index: 2, kind: input, shape index: {}]
  %s3 = inlined_call_operand.vmem [shape: f32[2,512,256], index: 3, kind: output, shape index: {}]
  %s4 = sld [smem:[#allocation0]]
  $region45: #{fcn_backbone_forward.1} parent=0
    _
  %s6 = ssub.s32 1, %s4
  %s7 = scalar_select 0, %s6, %s4
  loop: start=0, step=1, limit=4
  $region2: #{fcn_backbone_forward.1} parent=0 // loop_pre_header
    _
  $region3: #{fcn_backbone_forward.1} parent=0 // loop_header
    %s9 = sphi 0, %s13
    %p10 = scmp.ge.s32.totalorder %s9, 4
    %s16 = sphi 0, %s28
    %s17 = sphi 0, %s24
    %s18 = sphi 0, %s16
    %s19 = sphi 0, %s17
    %s20 = sphi 0, %s18
    %s21 = sphi 0, %s19
    %s33 = sphi 0, %s35
    %s36 = sphi 0, %s33
    %s37 = sphi 0, %s36
    %s53 = sphi 0, %s37
    %s57 = sphi 0, %s57
    %s59 = sphi 0, %s57
    %s60 = sphi 0, %s59
    %s74 = sphi 0, %s60
    %s78 = sphi 0, %s78
    %s80 = sphi 0, %s78
    %s81 = sphi 0, %s80
    %s95 = sphi 0, %s81
    %s103 = sphi 0, %s105
    %s106 = sphi 0, %s103
    %s107 = sphi 0, %s106
    %s123 = sphi 0, %s107
  $region4: #{fcn_backbone_forward.1} parent=0 // loop_header_branch
    %12 = sbr.rel (%p10) target = $region8
  $region5: #{fcn_backbone_forward.1} parent=0 // loop_body
    %s14 = ssub.s32 %s9, 1
    %s15 = ssub.s32 %s9, 2
    %s22 = sadd.s32 1, %s17
    %p23 = scmp.ge.s32.totalorder %s22, 1
    %s24 = scalar_select %p23, 0, %s22
    %s25 = sadd.s32 1, %s16
    %s26 = scalar_select %p23, %s25, %s16
    %p27 = scmp.ge.s32.totalorder %s26, 2
    %s28 = scalar_select %p27, 0, %s26
    %s29 = ssub.s32 %s16, %s28
    %s30 = ssub.s32 %s17, %s24
    %s31 = sor.u32 %s29, %s30
    %p32 = scmp.eq.s32.totalorder %s31, 0
    %s34 = sadd.s32 %s33, 1
    %s35 = scalar_select %p32, %s33, %s34
    %p38 = pneg %p32
    %p39 = scmp.eq.s32.totalorder %s9, 1
    %p40 = por %p38, %p39
    %p41 = scmp.ne.s32.totalorder %s33, %s36
    %p42 = scmp.eq.s32.totalorder %s9, 0
    %p43 = por %p41, %p42
    %p44 = scmp.ne.s32.totalorder %s33, %s36
    %p45 = scmp.eq.s32.totalorder %s14, 1
    %p46 = por %p44, %p45
    %p47 = scmp.ne.s32.totalorder %s36, %s37
    %p48 = scmp.eq.s32.totalorder %s14, 0
    %p49 = por %p47, %p48
    %p50 = scmp.ne.s32.totalorder %s36, %s37
    %p51 = scmp.eq.s32.totalorder %s15, 1
    %p52 = por %p50, %p51
    %p54 = scmp.ne.s32.totalorder %s37, %s53
    %p55 = scmp.eq.s32.totalorder %s15, 0
    %p56 = por %p54, %p55
    %s58 = sadd.s32 %s57, 1
    %p61 = scmp.eq.s32.totalorder %s9, 1
    %p62 = scmp.ne.s32.totalorder %s57, %s59
    %p63 = scmp.eq.s32.totalorder %s9, 0
    %p64 = por %p62, %p63
    %p65 = scmp.ne.s32.totalorder %s57, %s59
    %p66 = scmp.eq.s32.totalorder %s14, 1
    %p67 = por %p65, %p66
    %p68 = scmp.ne.s32.totalorder %s59, %s60
    %p69 = scmp.eq.s32.totalorder %s14, 0
    %p70 = por %p68, %p69
    %p71 = scmp.ne.s32.totalorder %s59, %s60
    %p72 = scmp.eq.s32.totalorder %s15, 1
    %p73 = por %p71, %p72
    %p75 = scmp.ne.s32.totalorder %s60, %s74
    %p76 = scmp.eq.s32.totalorder %s15, 0
    %p77 = por %p75, %p76
    %s79 = sadd.s32 %s78, 1
    %p82 = scmp.eq.s32.totalorder %s9, 1
    %p83 = scmp.ne.s32.totalorder %s78, %s80
    %p84 = scmp.eq.s32.totalorder %s9, 0
    %p85 = por %p83, %p84
    %p86 = scmp.ne.s32.totalorder %s78, %s80
    %p87 = scmp.eq.s32.totalorder %s14, 1
    %p88 = por %p86, %p87
    %p89 = scmp.ne.s32.totalorder %s80, %s81
    %p90 = scmp.eq.s32.totalorder %s14, 0
    %p91 = por %p89, %p90
    %p92 = scmp.ne.s32.totalorder %s80, %s81
    %p93 = scmp.eq.s32.totalorder %s15, 1
    %p94 = por %p92, %p93
    %p96 = scmp.ne.s32.totalorder %s81, %s95
    %p97 = scmp.eq.s32.totalorder %s15, 0
    %p98 = por %p96, %p97
    %s99 = ssub.s32 %s16, %s28
    %s100 = ssub.s32 %s17, %s24
    %s101 = sor.u32 %s99, %s100
    %p102 = scmp.eq.s32.totalorder %s101, 0
    %s104 = sadd.s32 %s103, 1
    %s105 = scalar_select %p102, %s103, %s104
    %p108 = pneg %p102
    %p109 = scmp.eq.s32.totalorder %s9, 1
    %p110 = por %p108, %p109
    %p111 = scmp.ne.s32.totalorder %s103, %s106
    %p112 = scmp.eq.s32.totalorder %s9, 0
    %p113 = por %p111, %p112
    %p114 = scmp.ne.s32.totalorder %s103, %s106
    %p115 = scmp.eq.s32.totalorder %s14, 1
    %p116 = por %p114, %p115
    %p117 = scmp.ne.s32.totalorder %s106, %s107
    %p118 = scmp.eq.s32.totalorder %s14, 0
    %p119 = por %p117, %p118
    %p120 = scmp.ne.s32.totalorder %s106, %s107
    %p121 = scmp.eq.s32.totalorder %s15, 1
    %p122 = por %p120, %p121
    %p124 = scmp.ne.s32.totalorder %s107, %s123
    %p125 = scmp.eq.s32.totalorder %s15, 0
    %p126 = por %p124, %p125
    %p127 = scmp.le.s32.totalorder 1, %s9
    %p128 = scmp.lt.s32.totalorder %s9, 3
    %p129 = pnand %p127, %p128
    %p130 = pneg %p129
    // Predicated region
    $region9: #{fcn_backbone_forward.1} parent=5 // pred_check
      _
    $region10: #{fcn_backbone_forward.1} parent=5 // pred_check_branch
      %132 = sbr.rel (%p129) target = $region12
    $region11: #{fcn_backbone_forward.1} parent=5 // pred_region
      %s133 = ssub.s32 %s9, 1
      // Predicated region
      $region13: #{fcn_backbone_forward.1} parent=11 // pred_check
        %p134 = pneg %p70
      $region14: #{fcn_backbone_forward.1} parent=11 // pred_check_branch
        %136 = sbr.rel (%p134) target = $region16
      $region15: #{fcn_backbone_forward.1} parent=11 // pred_region
        _
      $region16: #{fcn_backbone_forward.1} parent=11 // pred_fallthru
        _
      // Predicated region
      $region17: #{fcn_backbone_forward.1} parent=11 // pred_check
        %p137 = pneg %p91
      $region18: #{fcn_backbone_forward.1} parent=11 // pred_check_branch
        %139 = sbr.rel (%p137) target = $region20
      $region19: #{fcn_backbone_forward.1} parent=11 // pred_region
        _
      $region20: #{fcn_backbone_forward.1} parent=11 // pred_fallthru
        _
    $region12: #{fcn_backbone_forward.1} parent=5 // pred_fallthru
      _
    %p140 = scmp.lt.s32.totalorder %s9, 2
    // Predicated region
    $region21: #{fcn_backbone_forward.1} parent=5 // pred_check
      %p141 = pneg %p140
    $region22: #{fcn_backbone_forward.1} parent=5 // pred_check_branch
      %143 = sbr.rel (%p141) target = $region24
    $region23: #{fcn_backbone_forward.1} parent=5 // pred_region
      // Predicated region
      $region25: #{fcn_backbone_forward.1} parent=23 // pred_check
        %p144 = pneg %p43
      $region26: #{fcn_backbone_forward.1} parent=23 // pred_check_branch
        %146 = sbr.rel (%p144) target = $region28
      $region27: #{fcn_backbone_forward.1} parent=23 // pred_region
        %s147 = smul.u32 2, %s17
        %p148 = scmp.lt.s32.totalorder %s16, 1
        %s149 = scalar_select %p148, %s16, 1
        %p150 = scmp.lt.s32.totalorder %s147, 1
        %s151 = scalar_select %p150, %s147, 1
        %s152 = smul.addr %s149, 12
        %s153 = sadd.s32 %s151, %s152
        %s154 = smul.addr %s153, 4
        %s155 = scalar_lea.vmem %s0, %s154
        %s156 = smul.u32 2, %s17
      $region28: #{fcn_backbone_forward.1} parent=23 // pred_fallthru
        _
    $region24: #{fcn_backbone_forward.1} parent=5 // pred_fallthru
      _
    %p157 = scmp.le.s32.totalorder 1, %s9
    %p158 = scmp.lt.s32.totalorder %s9, 3
    %p159 = pnand %p157, %p158
    %p160 = pneg %p159
    // Predicated region
    $region29: #{fcn_backbone_forward.1} parent=5 // pred_check
      _
    $region30: #{fcn_backbone_forward.1} parent=5 // pred_check_branch
      %162 = sbr.rel (%p159) target = $region32
    $region31: #{fcn_backbone_forward.1} parent=5 // pred_region
      %s163 = ssub.s32 %s9, 1
      %s164 = smul.u32 2, %s19
      %p165 = scmp.lt.s32.totalorder %s18, 1
      %s166 = scalar_select %p165, %s18, 1
      %p167 = scmp.lt.s32.totalorder %s164, 1
      %s168 = scalar_select %p167, %s164, 1
      %s169 = smul.addr %s166, 12
      %s170 = sadd.s32 %s168, %s169
      %s171 = smul.addr %s170, 4
      %s172 = scalar_lea.vmem %s0, %s171
      %p173 = pneg %p49
      %p174 = pneg %p46
      %p175 = pneg %p70
      %p176 = pneg %p67
      %p177 = pneg %p91
      %p178 = pneg %p88
      %p179 = pneg %p119
      %p180 = pneg %p116
      %s181 = smul.u32 2, %s19
      %p182 = scmp.lt.s32.totalorder %s18, 1
      %s183 = scalar_select %p182, %s18, 1
      %p184 = scmp.lt.s32.totalorder %s181, 1
      %s185 = scalar_select %p184, %s181, 1
      %s186 = smul.addr %s183, 128
      %s187 = sadd.s32 %s185, %s186
      %s188 = smul.addr %s187, 8
      %s189 = scalar_lea.vmem %s3, %s188
      %s190 = smul.u32 2, %s19
      %p191 = scmp.lt.s32.totalorder %s18, 1
      %s192 = scalar_select %p191, %s18, 1
      %p193 = scmp.lt.s32.totalorder %s190, 1
      %s194 = scalar_select %p193, %s190, 1
      %s195 = smul.addr %s192, 12
      %s196 = sadd.s32 %s194, %s195
      %s197 = smul.addr %s196, 4
      %s198 = scalar_lea.vmem %s0, %s197
      %s199 = smul.u32 2, %s19
      %s200 = smul.u32 2, %s19
      %p201 = scmp.lt.s32.totalorder %s18, 1
      %s202 = scalar_select %p201, %s18, 1
      %p203 = scmp.lt.s32.totalorder %s200, 1
      %s204 = scalar_select %p203, %s200, 1
      %s205 = smul.addr %s202, 128
      %s206 = sadd.s32 %s204, %s205
      %s207 = smul.addr %s206, 8
      %s208 = scalar_lea.vmem %s3, %s207
      %s209 = smul.u32 2, %s19
      %v211 = vld [vmem:[%s1] sm:$0xf]
      %v212 = vld [vmem:[%s1 + $0x4] sm:$0xf]
      %v213 = vld [vmem:[%s1 + $0x8] sm:$0xf]
      %v214 = vld [vmem:[%s1 + $0xc] sm:$0xf]
      %v215 = vld [vmem:[%s1 + $0x10] sm:$0xf]
      %v216 = vld [vmem:[%s1 + $0x14] sm:$0xf]
      %v217 = vld [vmem:[%s1 + $0x18] sm:$0xf]
      %v218 = vld [vmem:[%s1 + $0x1c] sm:$0xf]
      %v219 = vld [vmem:[%s1 + $0x20] sm:$0xf]
      %v220 = vld [vmem:[%s1 + $0x24] sm:$0xf]
      %v221 = vld [vmem:[%s1 + $0x28] sm:$0xf]
      %v222 = vld [vmem:[%s1 + $0x2c] sm:$0xf]
      %v223 = vld [vmem:[%s1 + $0x30] sm:$0xf]
      %v224 = vld [vmem:[%s1 + $0x34] sm:$0xf]
      %v225 = vld [vmem:[%s1 + $0x38] sm:$0xf]
      %v226 = vld [vmem:[%s1 + $0x3c] sm:$0xf]
      %v227 = vld [vmem:[%s1 + $0x40] sm:$0xf]
      %v228 = vld [vmem:[%s1 + $0x44] sm:$0xf]
      %v229 = vld [vmem:[%s1 + $0x48] sm:$0xf]
      %v230 = vld [vmem:[%s1 + $0x4c] sm:$0xf]
      %v231 = vld [vmem:[%s1 + $0x50] sm:$0xf]
      %v232 = vld [vmem:[%s1 + $0x54] sm:$0xf]
      %v233 = vld [vmem:[%s1 + $0x58] sm:$0xf]
      %v234 = vld [vmem:[%s1 + $0x5c] sm:$0xf]
      %v235 = vld [vmem:[%s1 + $0x60] sm:$0xf]
      %v236 = vld [vmem:[%s1 + $0x64] sm:$0xf]
      %v237 = vld [vmem:[%s1 + $0x68] sm:$0xf]
      %v238 = vld [vmem:[%s1 + $0x6c] sm:$0xf]
      %v239 = vld [vmem:[%s1 + $0x70] sm:$0xf]
      %v240 = vld [vmem:[%s1 + $0x74] sm:$0xf]
      %v241 = vld [vmem:[%s1 + $0x78] sm:$0xf]
      %v242 = vld [vmem:[%s1 + $0x7c] sm:$0xf]
      %v243 = vld [vmem:[%s1 + $0x80] sm:$0xf]
      %v244 = vld [vmem:[%s1 + $0x84] sm:$0xf]
      %v245 = vld [vmem:[%s1 + $0x88] sm:$0xf]
      %v246 = vld [vmem:[%s1 + $0x8c] sm:$0xf]
      %v247 = vld [vmem:[%s1 + $0x90] sm:$0xf]
      %v248 = vld [vmem:[%s1 + $0x94] sm:$0xf]
      %v249 = vld [vmem:[%s1 + $0x98] sm:$0xf]
      %v250 = vld [vmem:[%s1 + $0x9c] sm:$0xf]
      %v251 = vld [vmem:[%s1 + $0xa0] sm:$0xf]
      %v252 = vld [vmem:[%s1 + $0xa4] sm:$0xf]
      %v253 = vld [vmem:[%s1 + $0xa8] sm:$0xf]
      %v254 = vld [vmem:[%s1 + $0xac] sm:$0xf]
      %v255 = vld [vmem:[%s1 + $0xb0] sm:$0xf]
      %v256 = vld [vmem:[%s1 + $0xb4] sm:$0xf]
      %v257 = vld [vmem:[%s1 + $0xb8] sm:$0xf]
      %v258 = vld [vmem:[%s1 + $0xbc] sm:$0xf]
      %v259 = vld [vmem:[%s1 + $0xc0] sm:$0xf]
      %v260 = vld [vmem:[%s1 + $0xc4] sm:$0xf]
      %v261 = vld [vmem:[%s1 + $0xc8] sm:$0xf]
      %v262 = vld [vmem:[%s1 + $0xcc] sm:$0xf]
      %v263 = vld [vmem:[%s1 + $0xd0] sm:$0xf]
      %v264 = vld [vmem:[%s1 + $0xd4] sm:$0xf]
      %v265 = vld [vmem:[%s1 + $0xd8] sm:$0xf]
      %v266 = vld [vmem:[%s1 + $0xdc] sm:$0xf]
      %v267 = vld [vmem:[%s1 + $0xe0] sm:$0xf]
      %v268 = vld [vmem:[%s1 + $0xe4] sm:$0xf]
      %v269 = vld [vmem:[%s1 + $0xe8] sm:$0xf]
      %v270 = vld [vmem:[%s1 + $0xec] sm:$0xf]
      %v271 = vld [vmem:[%s1 + $0xf0] sm:$0xf]
      %v272 = vld [vmem:[%s1 + $0xf4] sm:$0xf]
      %v273 = vld [vmem:[%s1 + $0xf8] sm:$0xf]
      %v274 = vld [vmem:[%s1 + $0xfc] sm:$0xf]
      %v275 = vld [vmem:[%s198] sm:$0xff]
      %v276 = vld [vmem:[%s198 + $0x8] sm:$0xff]
      %v277 = vld [vmem:[%s198 + $0x10] sm:$0xff]
      %v278 = vld [vmem:[%s198 + $0x18] sm:$0xff]
      %v279 = vld [vmem:[%s198 + $0x20] sm:$0xff]
      %v280 = vld [vmem:[%s198 + $0x28] sm:$0xff]
      %v281 = vld [vmem:[%s2] sm:$0xff]
      %v282 = vld [vmem:[%s2 + $0x8] sm:$0xff]
      %v283 = vld [vmem:[%s2 + $0x10] sm:$0xff]
      %v284 = vld [vmem:[%s2 + $0x18] sm:$0xff]
      %v285 = vld [vmem:[%s2 + $0x20] sm:$0xff]
      %v286 = vld [vmem:[%s2 + $0x28] sm:$0xff]
      %v287 = vld [vmem:[%s2 + $0x30] sm:$0xff]
      %v288 = vld [vmem:[%s2 + $0x38] sm:$0xff]
      %v289 = vld [vmem:[%s2 + $0x40] sm:$0xff]
      %v290 = vld [vmem:[%s2 + $0x48] sm:$0xff]
      %v291 = vld [vmem:[%s2 + $0x50] sm:$0xff]
      %v292 = vld [vmem:[%s2 + $0x58] sm:$0xff]
      %v293 = vld [vmem:[%s2 + $0x60] sm:$0xff]
      %v294 = vld [vmem:[%s2 + $0x68] sm:$0xff]
      %v295 = vld [vmem:[%s2 + $0x70] sm:$0xff]
      %v296 = vld [vmem:[%s2 + $0x78] sm:$0xff]
      %v297 = vld [vmem:[%s2 + $0x80] sm:$0xff]
      %v298 = vld [vmem:[%s2 + $0x88] sm:$0xff]
      %v299 = vld [vmem:[%s2 + $0x90] sm:$0xff]
      %v300 = vld [vmem:[%s2 + $0x98] sm:$0xff]
      %v301 = vld [vmem:[%s2 + $0xa0] sm:$0xff]
      %v302 = vld [vmem:[%s2 + $0xa8] sm:$0xff]
      %v303 = vld [vmem:[%s2 + $0xb0] sm:$0xff]
      %v304 = vld [vmem:[%s2 + $0xb8] sm:$0xff]
      %v305 = vld [vmem:[%s2 + $0xc0] sm:$0xff]
      %v306 = vld [vmem:[%s2 + $0xc8] sm:$0xff]
      %v307 = vld [vmem:[%s2 + $0xd0] sm:$0xff]
      %v308 = vld [vmem:[%s2 + $0xd8] sm:$0xff]
      %v309 = vld [vmem:[%s2 + $0xe0] sm:$0xff]
      %v310 = vld [vmem:[%s2 + $0xe8] sm:$0xff]
      %v311 = vld [vmem:[%s2 + $0xf0] sm:$0xff]
      %v312 = vld [vmem:[%s2 + $0xf8] sm:$0xff]
      %v313 = vld [vmem:[%s2 + $0x100] sm:$0xff]
      %v314 = vld [vmem:[%s2 + $0x108] sm:$0xff]
      %v315 = vld [vmem:[%s2 + $0x110] sm:$0xff]
      %v316 = vld [vmem:[%s2 + $0x118] sm:$0xff]
      %v317 = vld [vmem:[%s2 + $0x120] sm:$0xff]
      %v318 = vld [vmem:[%s2 + $0x128] sm:$0xff]
      %v319 = vld [vmem:[%s2 + $0x130] sm:$0xff]
      %v320 = vld [vmem:[%s2 + $0x138] sm:$0xff]
      %v321 = vld [vmem:[%s2 + $0x140] sm:$0xff]
      %v322 = vld [vmem:[%s2 + $0x148] sm:$0xff]
      %v323 = vld [vmem:[%s2 + $0x150] sm:$0xff]
      %v324 = vld [vmem:[%s2 + $0x158] sm:$0xff]
      %v325 = vld [vmem:[%s2 + $0x160] sm:$0xff]
      %v326 = vld [vmem:[%s2 + $0x168] sm:$0xff]
      %v327 = vld [vmem:[%s2 + $0x170] sm:$0xff]
      %v328 = vld [vmem:[%s2 + $0x178] sm:$0xff]
      %v329 = vld [vmem:[%s2 + $0x180] sm:$0xff]
      %v330 = vld [vmem:[%s2 + $0x188] sm:$0xff]
      %v331 = vld [vmem:[%s2 + $0x190] sm:$0xff]
      %v332 = vld [vmem:[%s2 + $0x198] sm:$0xff]
      %v333 = vld [vmem:[%s2 + $0x1a0] sm:$0xff]
      %v334 = vld [vmem:[%s2 + $0x1a8] sm:$0xff]
      %v335 = vld [vmem:[%s2 + $0x1b0] sm:$0xff]
      %v336 = vld [vmem:[%s2 + $0x1b8] sm:$0xff]
      %v337 = vld [vmem:[%s2 + $0x1c0] sm:$0xff]
      %v338 = vld [vmem:[%s2 + $0x1c8] sm:$0xff]
      %v339 = vld [vmem:[%s2 + $0x1d0] sm:$0xff]
      %v340 = vld [vmem:[%s2 + $0x1d8] sm:$0xff]
      %v341 = vld [vmem:[%s2 + $0x1e0] sm:$0xff]
      %v342 = vld [vmem:[%s2 + $0x1e8] sm:$0xff]
      %v343 = vld [vmem:[%s2 + $0x1f0] sm:$0xff]
      %v344 = vld [vmem:[%s2 + $0x1f8] sm:$0xff]
      %346 = vset.pattern.permute.xlu0 0
      %347 = vperm.xlu0 %346, %v281
      %v348 = vpop.permute.xlu0 %347
      %351 = vset.pattern.permute.xlu0 0
      %352 = vperm.xlu0 %351, %v282
      %v353 = vpop.permute.xlu0 %352
      %356 = vset.pattern.permute.xlu0 0
      %357 = vperm.xlu0 %356, %v283
      %v358 = vpop.permute.xlu0 %357
      %361 = vset.pattern.permute.xlu0 0
      %362 = vperm.xlu0 %361, %v284
      %v363 = vpop.permute.xlu0 %362
      %366 = vset.pattern.permute.xlu0 0
      %367 = vperm.xlu0 %366, %v285
      %v368 = vpop.permute.xlu0 %367
      %371 = vset.pattern.permute.xlu0 0
      %372 = vperm.xlu0 %371, %v286
      %v373 = vpop.permute.xlu0 %372
      %376 = vset.pattern.permute.xlu0 0
      %377 = vperm.xlu0 %376, %v287
      %v378 = vpop.permute.xlu0 %377
      %381 = vset.pattern.permute.xlu0 0
      %382 = vperm.xlu0 %381, %v288
      %v383 = vpop.permute.xlu0 %382
      %386 = vset.pattern.permute.xlu0 0
      %387 = vperm.xlu0 %386, %v289
      %v388 = vpop.permute.xlu0 %387
      %391 = vset.pattern.permute.xlu0 0
      %392 = vperm.xlu0 %391, %v290
      %v393 = vpop.permute.xlu0 %392
      %396 = vset.pattern.permute.xlu0 0
      %397 = vperm.xlu0 %396, %v291
      %v398 = vpop.permute.xlu0 %397
      %401 = vset.pattern.permute.xlu0 0
      %402 = vperm.xlu0 %401, %v292
      %v403 = vpop.permute.xlu0 %402
      %406 = vset.pattern.permute.xlu0 0
      %407 = vperm.xlu0 %406, %v293
      %v408 = vpop.permute.xlu0 %407
      %411 = vset.pattern.permute.xlu0 0
      %412 = vperm.xlu0 %411, %v294
      %v413 = vpop.permute.xlu0 %412
      %416 = vset.pattern.permute.xlu0 0
      %417 = vperm.xlu0 %416, %v295
      %v418 = vpop.permute.xlu0 %417
      %421 = vset.pattern.permute.xlu0 0
      %422 = vperm.xlu0 %421, %v296
      %v423 = vpop.permute.xlu0 %422
      %426 = vset.pattern.permute.xlu0 0
      %427 = vperm.xlu0 %426, %v297
      %v428 = vpop.permute.xlu0 %427
      %431 = vset.pattern.permute.xlu0 0
      %432 = vperm.xlu0 %431, %v298
      %v433 = vpop.permute.xlu0 %432
      %436 = vset.pattern.permute.xlu0 0
      %437 = vperm.xlu0 %436, %v299
      %v438 = vpop.permute.xlu0 %437
      %441 = vset.pattern.permute.xlu0 0
      %442 = vperm.xlu0 %441, %v300
      %v443 = vpop.permute.xlu0 %442
      %446 = vset.pattern.permute.xlu0 0
      %447 = vperm.xlu0 %446, %v301
      %v448 = vpop.permute.xlu0 %447
      %451 = vset.pattern.permute.xlu0 0
      %452 = vperm.xlu0 %451, %v302
      %v453 = vpop.permute.xlu0 %452
      %456 = vset.pattern.permute.xlu0 0
      %457 = vperm.xlu0 %456, %v303
      %v458 = vpop.permute.xlu0 %457
      %461 = vset.pattern.permute.xlu0 0
      %462 = vperm.xlu0 %461, %v304
      %v463 = vpop.permute.xlu0 %462
      %466 = vset.pattern.permute.xlu0 0
      %467 = vperm.xlu0 %466, %v305
      %v468 = vpop.permute.xlu0 %467
      %471 = vset.pattern.permute.xlu0 0
      %472 = vperm.xlu0 %471, %v306
      %v473 = vpop.permute.xlu0 %472
      %476 = vset.pattern.permute.xlu0 0
      %477 = vperm.xlu0 %476, %v307
      %v478 = vpop.permute.xlu0 %477
      %481 = vset.pattern.permute.xlu0 0
      %482 = vperm.xlu0 %481, %v308
      %v483 = vpop.permute.xlu0 %482
      %486 = vset.pattern.permute.xlu0 0
      %487 = vperm.xlu0 %486, %v309
      %v488 = vpop.permute.xlu0 %487
      %491 = vset.pattern.permute.xlu0 0
      %492 = vperm.xlu0 %491, %v310
      %v493 = vpop.permute.xlu0 %492
      %496 = vset.pattern.permute.xlu0 0
      %497 = vperm.xlu0 %496, %v311
      %v498 = vpop.permute.xlu0 %497
      %501 = vset.pattern.permute.xlu0 0
      %502 = vperm.xlu0 %501, %v312
      %v503 = vpop.permute.xlu0 %502
      %506 = vset.pattern.permute.xlu0 0
      %507 = vperm.xlu0 %506, %v313
      %v508 = vpop.permute.xlu0 %507
      %511 = vset.pattern.permute.xlu0 0
      %512 = vperm.xlu0 %511, %v314
      %v513 = vpop.permute.xlu0 %512
      %516 = vset.pattern.permute.xlu0 0
      %517 = vperm.xlu0 %516, %v315
      %v518 = vpop.permute.xlu0 %517
      %521 = vset.pattern.permute.xlu0 0
      %522 = vperm.xlu0 %521, %v316
      %v523 = vpop.permute.xlu0 %522
      %526 = vset.pattern.permute.xlu0 0
      %527 = vperm.xlu0 %526, %v317
      %v528 = vpop.permute.xlu0 %527
      %531 = vset.pattern.permute.xlu0 0
      %532 = vperm.xlu0 %531, %v318
      %v533 = vpop.permute.xlu0 %532
      %536 = vset.pattern.permute.xlu0 0
      %537 = vperm.xlu0 %536, %v319
      %v538 = vpop.permute.xlu0 %537
      %541 = vset.pattern.permute.xlu0 0
      %542 = vperm.xlu0 %541, %v320
      %v543 = vpop.permute.xlu0 %542
      %546 = vset.pattern.permute.xlu0 0
      %547 = vperm.xlu0 %546, %v321
      %v548 = vpop.permute.xlu0 %547
      %551 = vset.pattern.permute.xlu0 0
      %552 = vperm.xlu0 %551, %v322
      %v553 = vpop.permute.xlu0 %552
      %556 = vset.pattern.permute.xlu0 0
      %557 = vperm.xlu0 %556, %v323
      %v558 = vpop.permute.xlu0 %557
      %561 = vset.pattern.permute.xlu0 0
      %562 = vperm.xlu0 %561, %v324
      %v563 = vpop.permute.xlu0 %562
      %566 = vset.pattern.permute.xlu0 0
      %567 = vperm.xlu0 %566, %v325
      %v568 = vpop.permute.xlu0 %567
      %571 = vset.pattern.permute.xlu0 0
      %572 = vperm.xlu0 %571, %v326
      %v573 = vpop.permute.xlu0 %572
      %576 = vset.pattern.permute.xlu0 0
      %577 = vperm.xlu0 %576, %v327
      %v578 = vpop.permute.xlu0 %577
      %581 = vset.pattern.permute.xlu0 0
      %582 = vperm.xlu0 %581, %v328
      %v583 = vpop.permute.xlu0 %582
      %586 = vset.pattern.permute.xlu0 0
      %587 = vperm.xlu0 %586, %v329
      %v588 = vpop.permute.xlu0 %587
      %591 = vset.pattern.permute.xlu0 0
      %592 = vperm.xlu0 %591, %v330
      %v593 = vpop.permute.xlu0 %592
      %596 = vset.pattern.permute.xlu0 0
      %597 = vperm.xlu0 %596, %v331
      %v598 = vpop.permute.xlu0 %597
      %601 = vset.pattern.permute.xlu0 0
      %602 = vperm.xlu0 %601, %v332
      %v603 = vpop.permute.xlu0 %602
      %606 = vset.pattern.permute.xlu0 0
      %607 = vperm.xlu0 %606, %v333
      %v608 = vpop.permute.xlu0 %607
      %611 = vset.pattern.permute.xlu0 0
      %612 = vperm.xlu0 %611, %v334
      %v613 = vpop.permute.xlu0 %612
      %616 = vset.pattern.permute.xlu0 0
      %617 = vperm.xlu0 %616, %v335
      %v618 = vpop.permute.xlu0 %617
      %621 = vset.pattern.permute.xlu0 0
      %622 = vperm.xlu0 %621, %v336
      %v623 = vpop.permute.xlu0 %622
      %626 = vset.pattern.permute.xlu0 0
      %627 = vperm.xlu0 %626, %v337
      %v628 = vpop.permute.xlu0 %627
      %631 = vset.pattern.permute.xlu0 0
      %632 = vperm.xlu0 %631, %v338
      %v633 = vpop.permute.xlu0 %632
      %636 = vset.pattern.permute.xlu0 0
      %637 = vperm.xlu0 %636, %v339
      %v638 = vpop.permute.xlu0 %637
      %641 = vset.pattern.permute.xlu0 0
      %642 = vperm.xlu0 %641, %v340
      %v643 = vpop.permute.xlu0 %642
      %646 = vset.pattern.permute.xlu0 0
      %647 = vperm.xlu0 %646, %v341
      %v648 = vpop.permute.xlu0 %647
      %651 = vset.pattern.permute.xlu0 0
      %652 = vperm.xlu0 %651, %v342
      %v653 = vpop.permute.xlu0 %652
      %656 = vset.pattern.permute.xlu0 0
      %657 = vperm.xlu0 %656, %v343
      %v658 = vpop.permute.xlu0 %657
      %661 = vset.pattern.permute.xlu0 0
      %662 = vperm.xlu0 %661, %v344
      %v663 = vpop.permute.xlu0 %662
      %v729 = vunpack.c.l.b16 %v211
      %v730 = vunpack.c.l.b16 %v212
      %v731 = vunpack.c.l.b16 %v213
      %v732 = vunpack.c.l.b16 %v214
      %v733 = vunpack.c.l.b16 %v215
      %v734 = vunpack.c.l.b16 %v216
      %v735 = vunpack.c.l.b16 %v217
      %v736 = vunpack.c.l.b16 %v218
      %v737 = vunpack.c.l.b16 %v219
      %v738 = vunpack.c.l.b16 %v220
      %v739 = vunpack.c.l.b16 %v221
      %v740 = vunpack.c.l.b16 %v222
      %v741 = vunpack.c.l.b16 %v223
      %v742 = vunpack.c.l.b16 %v224
      %v743 = vunpack.c.l.b16 %v225
      %v744 = vunpack.c.l.b16 %v226
      %v745 = vunpack.c.l.b16 %v227
      %v746 = vunpack.c.l.b16 %v228
      %v747 = vunpack.c.l.b16 %v229
      %v748 = vunpack.c.l.b16 %v230
      %v749 = vunpack.c.l.b16 %v231
      %v750 = vunpack.c.l.b16 %v232
      %v751 = vunpack.c.l.b16 %v233
      %v752 = vunpack.c.l.b16 %v234
      %v753 = vunpack.c.l.b16 %v235
      %v754 = vunpack.c.l.b16 %v236
      %v755 = vunpack.c.l.b16 %v237
      %v756 = vunpack.c.l.b16 %v238
      %v757 = vunpack.c.l.b16 %v239
      %v758 = vunpack.c.l.b16 %v240
      %v759 = vunpack.c.l.b16 %v241
      %v760 = vunpack.c.l.b16 %v242
      %v761 = vunpack.c.l.b16 %v243
      %v762 = vunpack.c.l.b16 %v244
      %v763 = vunpack.c.l.b16 %v245
      %v764 = vunpack.c.l.b16 %v246
      %v765 = vunpack.c.l.b16 %v247
      %v766 = vunpack.c.l.b16 %v248
      %v767 = vunpack.c.l.b16 %v249
      %v768 = vunpack.c.l.b16 %v250
      %v769 = vunpack.c.l.b16 %v251
      %v770 = vunpack.c.l.b16 %v252
      %v771 = vunpack.c.l.b16 %v253
      %v772 = vunpack.c.l.b16 %v254
      %v773 = vunpack.c.l.b16 %v255
      %v774 = vunpack.c.l.b16 %v256
      %v775 = vunpack.c.l.b16 %v257
      %v776 = vunpack.c.l.b16 %v258
      %v777 = vunpack.c.l.b16 %v259
      %v778 = vunpack.c.l.b16 %v260
      %v779 = vunpack.c.l.b16 %v261
      %v780 = vunpack.c.l.b16 %v262
      %v781 = vunpack.c.l.b16 %v263
      %v782 = vunpack.c.l.b16 %v264
      %v783 = vunpack.c.l.b16 %v265
      %v784 = vunpack.c.l.b16 %v266
      %v785 = vunpack.c.l.b16 %v267
      %v786 = vunpack.c.l.b16 %v268
      %v787 = vunpack.c.l.b16 %v269
      %v788 = vunpack.c.l.b16 %v270
      %v789 = vunpack.c.l.b16 %v271
      %v790 = vunpack.c.l.b16 %v272
      %v791 = vunpack.c.l.b16 %v273
      %v792 = vunpack.c.l.b16 %v274
      %v793 = vpack.c.b16 %v730, %v729
      %v794 = vpack.c.b16 %v732, %v731
      %v795 = vpack.c.b16 %v734, %v733
      %v796 = vpack.c.b16 %v736, %v735
      %v797 = vpack.c.b16 %v738, %v737
      %v798 = vpack.c.b16 %v740, %v739
      %v799 = vpack.c.b16 %v742, %v741
      %v800 = vpack.c.b16 %v744, %v743
      %v801 = vpack.c.b16 %v746, %v745
      %v802 = vpack.c.b16 %v748, %v747
      %v803 = vpack.c.b16 %v750, %v749
      %v804 = vpack.c.b16 %v752, %v751
      %v805 = vpack.c.b16 %v754, %v753
      %v806 = vpack.c.b16 %v756, %v755
      %v807 = vpack.c.b16 %v758, %v757
      %v808 = vpack.c.b16 %v760, %v759
      %v809 = vpack.c.b16 %v762, %v761
      %v810 = vpack.c.b16 %v764, %v763
      %v811 = vpack.c.b16 %v766, %v765
      %v812 = vpack.c.b16 %v768, %v767
      %v813 = vpack.c.b16 %v770, %v769
      %v814 = vpack.c.b16 %v772, %v771
      %v815 = vpack.c.b16 %v774, %v773
      %v816 = vpack.c.b16 %v776, %v775
      %v817 = vpack.c.b16 %v778, %v777
      %v818 = vpack.c.b16 %v780, %v779
      %v819 = vpack.c.b16 %v782, %v781
      %v820 = vpack.c.b16 %v784, %v783
      %v821 = vpack.c.b16 %v786, %v785
      %v822 = vpack.c.b16 %v788, %v787
      %v823 = vpack.c.b16 %v790, %v789
      %v824 = vpack.c.b16 %v792, %v791
      %v831 = vunpack.c.l.b16 %v275
      %v832 = vunpack.c.h.b16 %v275
      %v833 = vunpack.c.l.b16 %v276
      %v834 = vunpack.c.h.b16 %v276
      %v835 = vunpack.c.l.b16 %v277
      %v836 = vunpack.c.h.b16 %v277
      %v837 = vunpack.c.l.b16 %v278
      %v838 = vunpack.c.h.b16 %v278
      %v839 = vunpack.c.l.b16 %v279
      %v840 = vunpack.c.h.b16 %v279
      %v841 = vunpack.c.l.b16 %v280
      %v842 = vunpack.c.h.b16 %v280
      %v843 = vpack.c.b16 %v833, %v831
      %v844 = vpack.c.b16 %v834, %v832
      %v845 = vpack.c.b16 %v837, %v835
      %v846 = vpack.c.b16 %v838, %v836
      %v847 = vpack.c.b16 %v841, %v839
      %v848 = vpack.c.b16 %v842, %v840
      %vm855 = vcmask 392192
      %v857 = vsel %vm855, %v793, 0
      %v860 = vsel %vm855, %v794, 0
      %v863 = vsel %vm855, %v795, 0
      %v866 = vsel %vm855, %v796, 0
      %v869 = vsel %vm855, %v797, 0
      %v872 = vsel %vm855, %v798, 0
      %v875 = vsel %vm855, %v799, 0
      %v878 = vsel %vm855, %v800, 0
      %v881 = vsel %vm855, %v801, 0
      %v884 = vsel %vm855, %v802, 0
      %v887 = vsel %vm855, %v803, 0
      %v890 = vsel %vm855, %v804, 0
      %v893 = vsel %vm855, %v805, 0
      %v896 = vsel %vm855, %v806, 0
      %v899 = vsel %vm855, %v807, 0
      %v902 = vsel %vm855, %v808, 0
      %v905 = vsel %vm855, %v809, 0
      %v908 = vsel %vm855, %v810, 0
      %v911 = vsel %vm855, %v811, 0
      %v914 = vsel %vm855, %v812, 0
      %v917 = vsel %vm855, %v813, 0
      %v920 = vsel %vm855, %v814, 0
      %v923 = vsel %vm855, %v815, 0
      %v926 = vsel %vm855, %v816, 0
      %v929 = vsel %vm855, %v817, 0
      %v932 = vsel %vm855, %v818, 0
      %v935 = vsel %vm855, %v819, 0
      %v938 = vsel %vm855, %v820, 0
      %v941 = vsel %vm855, %v821, 0
      %v944 = vsel %vm855, %v822, 0
      %v947 = vsel %vm855, %v823, 0
      %v950 = vsel %vm855, %v824, 0
      %952 = vmatpush.bf16.msra.mxu0 0
      %953 = vmatpush.bf16.msra.mxu0 0
      %954 = vmatpush.bf16.msra.mxu0 0
      %955 = vmatpush.bf16.msra.mxu0 0
      %956 = vmatpush.bf16.msra.mxu0 0
      %957 = vmatpush.bf16.msra.mxu0 %v847
      %958 = vmatpush.bf16.msra.mxu0 %v845
      %959 = vmatpush.bf16.msra.mxu0 %v843
      %960 = vmatmul.bf16.gmra.mxu0 %v857
      %v961 = vpop.f32.mrf.mxu0
      %v962 = vadd.f32 %v348, %v961
      %v963 = vpop.f32.mrf.mxu0
      %v964 = vadd.f32 %v353, %v963
      %965 = vmatmul.bf16.gmra.mxu0 %v860
      %v966 = vpop.f32.mrf.mxu0
      %v967 = vadd.f32 %v358, %v966
      %v968 = vpop.f32.mrf.mxu0
      %v969 = vadd.f32 %v363, %v968
      %970 = vmatmul.bf16.gmra.mxu0 %v863
      %v971 = vpop.f32.mrf.mxu0
      %v972 = vadd.f32 %v368, %v971
      %v973 = vpop.f32.mrf.mxu0
      %v974 = vadd.f32 %v373, %v973
      %975 = vmatmul.bf16.gmra.mxu0 %v866
      %v976 = vpop.f32.mrf.mxu0
      %v977 = vadd.f32 %v378, %v976
      %v978 = vpop.f32.mrf.mxu0
      %v979 = vadd.f32 %v383, %v978
      %980 = vmatmul.bf16.gmra.mxu0 %v869
      %v981 = vpop.f32.mrf.mxu0
      %v982 = vadd.f32 %v388, %v981
      %v983 = vpop.f32.mrf.mxu0
      %v984 = vadd.f32 %v393, %v983
      %985 = vmatmul.bf16.gmra.mxu0 %v872
      %v986 = vpop.f32.mrf.mxu0
      %v987 = vadd.f32 %v398, %v986
      %v988 = vpop.f32.mrf.mxu0
      %v989 = vadd.f32 %v403, %v988
      %990 = vmatmul.bf16.gmra.mxu0 %v875
      %v991 = vpop.f32.mrf.mxu0
      %v992 = vadd.f32 %v408, %v991
      %v993 = vpop.f32.mrf.mxu0
      %v994 = vadd.f32 %v413, %v993
      %995 = vmatmul.bf16.gmra.mxu0 %v878
      %v996 = vpop.f32.mrf.mxu0
      %v997 = vadd.f32 %v418, %v996
      %v998 = vpop.f32.mrf.mxu0
      %v999 = vadd.f32 %v423, %v998
      %1000 = vmatmul.bf16.gmra.mxu0 %v881
      %v1001 = vpop.f32.mrf.mxu0
      %v1002 = vadd.f32 %v428, %v1001
      %v1003 = vpop.f32.mrf.mxu0
      %v1004 = vadd.f32 %v433, %v1003
      %1005 = vmatmul.bf16.gmra.mxu0 %v884
      %v1006 = vpop.f32.mrf.mxu0
      %v1007 = vadd.f32 %v438, %v1006
      %v1008 = vpop.f32.mrf.mxu0
      %v1009 = vadd.f32 %v443, %v1008
      %1010 = vmatmul.bf16.gmra.mxu0 %v887
      %v1011 = vpop.f32.mrf.mxu0
      %v1012 = vadd.f32 %v448, %v1011
      %v1013 = vpop.f32.mrf.mxu0
      %v1014 = vadd.f32 %v453, %v1013
      %1015 = vmatmul.bf16.gmra.mxu0 %v890
      %v1016 = vpop.f32.mrf.mxu0
      %v1017 = vadd.f32 %v458, %v1016
      %v1018 = vpop.f32.mrf.mxu0
      %v1019 = vadd.f32 %v463, %v1018
      %1020 = vmatmul.bf16.gmra.mxu0 %v893
      %v1021 = vpop.f32.mrf.mxu0
      %v1022 = vadd.f32 %v468, %v1021
      %v1023 = vpop.f32.mrf.mxu0
      %v1024 = vadd.f32 %v473, %v1023
      %1025 = vmatmul.bf16.gmra.mxu0 %v896
      %v1026 = vpop.f32.mrf.mxu0
      %v1027 = vadd.f32 %v478, %v1026
      %v1028 = vpop.f32.mrf.mxu0
      %v1029 = vadd.f32 %v483, %v1028
      %1030 = vmatmul.bf16.gmra.mxu0 %v899
      %v1031 = vpop.f32.mrf.mxu0
      %v1032 = vadd.f32 %v488, %v1031
      %v1033 = vpop.f32.mrf.mxu0
      %v1034 = vadd.f32 %v493, %v1033
      %1035 = vmatmul.bf16.gmra.mxu0 %v902
      %v1036 = vpop.f32.mrf.mxu0
      %v1037 = vadd.f32 %v498, %v1036
      %v1038 = vpop.f32.mrf.mxu0
      %v1039 = vadd.f32 %v503, %v1038
      %1040 = vmatmul.bf16.gmra.mxu0 %v905
      %v1041 = vpop.f32.mrf.mxu0
      %v1042 = vadd.f32 %v508, %v1041
      %v1043 = vpop.f32.mrf.mxu0
      %v1044 = vadd.f32 %v513, %v1043
      %1045 = vmatmul.bf16.gmra.mxu0 %v908
      %v1046 = vpop.f32.mrf.mxu0
      %v1047 = vadd.f32 %v518, %v1046
      %v1048 = vpop.f32.mrf.mxu0
      %v1049 = vadd.f32 %v523, %v1048
      %1050 = vmatmul.bf16.gmra.mxu0 %v911
      %v1051 = vpop.f32.mrf.mxu0
      %v1052 = vadd.f32 %v528, %v1051
      %v1053 = vpop.f32.mrf.mxu0
      %v1054 = vadd.f32 %v533, %v1053
      %1055 = vmatmul.bf16.gmra.mxu0 %v914
      %v1056 = vpop.f32.mrf.mxu0
      %v1057 = vadd.f32 %v538, %v1056
      %v1058 = vpop.f32.mrf.mxu0
      %v1059 = vadd.f32 %v543, %v1058
      %1060 = vmatmul.bf16.gmra.mxu0 %v917
      %v1061 = vpop.f32.mrf.mxu0
      %v1062 = vadd.f32 %v548, %v1061
      %v1063 = vpop.f32.mrf.mxu0
      %v1064 = vadd.f32 %v553, %v1063
      %1065 = vmatmul.bf16.gmra.mxu0 %v920
      %v1066 = vpop.f32.mrf.mxu0
      %v1067 = vadd.f32 %v558, %v1066
      %v1068 = vpop.f32.mrf.mxu0
      %v1069 = vadd.f32 %v563, %v1068
      %1070 = vmatmul.bf16.gmra.mxu0 %v923
      %v1071 = vpop.f32.mrf.mxu0
      %v1072 = vadd.f32 %v568, %v1071
      %v1073 = vpop.f32.mrf.mxu0
      %v1074 = vadd.f32 %v573, %v1073
      %1075 = vmatmul.bf16.gmra.mxu0 %v926
      %v1076 = vpop.f32.mrf.mxu0
      %v1077 = vadd.f32 %v578, %v1076
      %v1078 = vpop.f32.mrf.mxu0
      %v1079 = vadd.f32 %v583, %v1078
      %1080 = vmatmul.bf16.gmra.mxu0 %v929
      %v1081 = vpop.f32.mrf.mxu0
      %v1082 = vadd.f32 %v588, %v1081
      %v1083 = vpop.f32.mrf.mxu0
      %v1084 = vadd.f32 %v593, %v1083
      %1085 = vmatmul.bf16.gmra.mxu0 %v932
      %v1086 = vpop.f32.mrf.mxu0
      %v1087 = vadd.f32 %v598, %v1086
      %v1088 = vpop.f32.mrf.mxu0
      %v1089 = vadd.f32 %v603, %v1088
      %1090 = vmatmul.bf16.gmra.mxu0 %v935
      %v1091 = vpop.f32.mrf.mxu0
      %v1092 = vadd.f32 %v608, %v1091
      %v1093 = vpop.f32.mrf.mxu0
      %v1094 = vadd.f32 %v613, %v1093
      %1095 = vmatmul.bf16.gmra.mxu0 %v938
      %v1096 = vpop.f32.mrf.mxu0
      %v1097 = vadd.f32 %v618, %v1096
      %v1098 = vpop.f32.mrf.mxu0
      %v1099 = vadd.f32 %v623, %v1098
      %1100 = vmatmul.bf16.gmra.mxu0 %v941
      %v1101 = vpop.f32.mrf.mxu0
      %v1102 = vadd.f32 %v628, %v1101
      %v1103 = vpop.f32.mrf.mxu0
      %v1104 = vadd.f32 %v633, %v1103
      %1105 = vmatmul.bf16.gmra.mxu0 %v944
      %v1106 = vpop.f32.mrf.mxu0
      %v1107 = vadd.f32 %v638, %v1106
      %v1108 = vpop.f32.mrf.mxu0
      %v1109 = vadd.f32 %v643, %v1108
      %1110 = vmatmul.bf16.gmra.mxu0 %v947
      %v1111 = vpop.f32.mrf.mxu0
      %v1112 = vadd.f32 %v648, %v1111
      %v1113 = vpop.f32.mrf.mxu0
      %v1114 = vadd.f32 %v653, %v1113
      %1115 = vmatmul.bf16.gmra.mxu0 %v950
      %v1116 = vpop.f32.mrf.mxu0
      %v1117 = vadd.f32 %v658, %v1116
      %v1118 = vpop.f32.mrf.mxu0
      %v1119 = vadd.f32 %v663, %v1118
      %1120 = vdwg.mxu0
      %1121 = vmatpush.bf16.msra.mxu0 0
      %1122 = vmatpush.bf16.msra.mxu0 0
      %1123 = vmatpush.bf16.msra.mxu0 0
      %1124 = vmatpush.bf16.msra.mxu0 0
      %1125 = vmatpush.bf16.msra.mxu0 0
      %1126 = vmatpush.bf16.msra.mxu0 %v848
      %1127 = vmatpush.bf16.msra.mxu0 %v846
      %1128 = vmatpush.bf16.msra.mxu0 %v844
      %1129 = vmatmul.bf16.gmra.mxu0 %v857
      %v1130 = vpop.f32.mrf.mxu0
      %v1131 = vadd.f32 %v348, %v1130
      %v1132 = vpop.f32.mrf.mxu0
      %v1133 = vadd.f32 %v353, %v1132
      %1134 = vmatmul.bf16.gmra.mxu0 %v860
      %v1135 = vpop.f32.mrf.mxu0
      %v1136 = vadd.f32 %v358, %v1135
      %v1137 = vpop.f32.mrf.mxu0
      %v1138 = vadd.f32 %v363, %v1137
      %1139 = vmatmul.bf16.gmra.mxu0 %v863
      %v1140 = vpop.f32.mrf.mxu0
      %v1141 = vadd.f32 %v368, %v1140
      %v1142 = vpop.f32.mrf.mxu0
      %v1143 = vadd.f32 %v373, %v1142
      %1144 = vmatmul.bf16.gmra.mxu0 %v866
      %v1145 = vpop.f32.mrf.mxu0
      %v1146 = vadd.f32 %v378, %v1145
      %v1147 = vpop.f32.mrf.mxu0
      %v1148 = vadd.f32 %v383, %v1147
      %1149 = vmatmul.bf16.gmra.mxu0 %v869
      %v1150 = vpop.f32.mrf.mxu0
      %v1151 = vadd.f32 %v388, %v1150
      %v1152 = vpop.f32.mrf.mxu0
      %v1153 = vadd.f32 %v393, %v1152
      %1154 = vmatmul.bf16.gmra.mxu0 %v872
      %v1155 = vpop.f32.mrf.mxu0
      %v1156 = vadd.f32 %v398, %v1155
      %v1157 = vpop.f32.mrf.mxu0
      %v1158 = vadd.f32 %v403, %v1157
      %1159 = vmatmul.bf16.gmra.mxu0 %v875
      %v1160 = vpop.f32.mrf.mxu0
      %v1161 = vadd.f32 %v408, %v1160
      %v1162 = vpop.f32.mrf.mxu0
      %v1163 = vadd.f32 %v413, %v1162
      %1164 = vmatmul.bf16.gmra.mxu0 %v878
      %v1165 = vpop.f32.mrf.mxu0
      %v1166 = vadd.f32 %v418, %v1165
      %v1167 = vpop.f32.mrf.mxu0
      %v1168 = vadd.f32 %v423, %v1167
      %1169 = vmatmul.bf16.gmra.mxu0 %v881
      %v1170 = vpop.f32.mrf.mxu0
      %v1171 = vadd.f32 %v428, %v1170
      %v1172 = vpop.f32.mrf.mxu0
      %v1173 = vadd.f32 %v433, %v1172
      %1174 = vmatmul.bf16.gmra.mxu0 %v884
      %v1175 = vpop.f32.mrf.mxu0
      %v1176 = vadd.f32 %v438, %v1175
      %v1177 = vpop.f32.mrf.mxu0
      %v1178 = vadd.f32 %v443, %v1177
      %1179 = vmatmul.bf16.gmra.mxu0 %v887
      %v1180 = vpop.f32.mrf.mxu0
      %v1181 = vadd.f32 %v448, %v1180
      %v1182 = vpop.f32.mrf.mxu0
      %v1183 = vadd.f32 %v453, %v1182
      %1184 = vmatmul.bf16.gmra.mxu0 %v890
      %v1185 = vpop.f32.mrf.mxu0
      %v1186 = vadd.f32 %v458, %v1185
      %v1187 = vpop.f32.mrf.mxu0
      %v1188 = vadd.f32 %v463, %v1187
      %1189 = vmatmul.bf16.gmra.mxu0 %v893
      %v1190 = vpop.f32.mrf.mxu0
      %v1191 = vadd.f32 %v468, %v1190
      %v1192 = vpop.f32.mrf.mxu0
      %v1193 = vadd.f32 %v473, %v1192
      %1194 = vmatmul.bf16.gmra.mxu0 %v896
      %v1195 = vpop.f32.mrf.mxu0
      %v1196 = vadd.f32 %v478, %v1195
      %v1197 = vpop.f32.mrf.mxu0
      %v1198 = vadd.f32 %v483, %v1197
      %1199 = vmatmul.bf16.gmra.mxu0 %v899
      %v1200 = vpop.f32.mrf.mxu0
      %v1201 = vadd.f32 %v488, %v1200
      %v1202 = vpop.f32.mrf.mxu0
      %v1203 = vadd.f32 %v493, %v1202
      %1204 = vmatmul.bf16.gmra.mxu0 %v902
      %v1205 = vpop.f32.mrf.mxu0
      %v1206 = vadd.f32 %v498, %v1205
      %v1207 = vpop.f32.mrf.mxu0
      %v1208 = vadd.f32 %v503, %v1207
      %1209 = vmatmul.bf16.gmra.mxu0 %v905
      %v1210 = vpop.f32.mrf.mxu0
      %v1211 = vadd.f32 %v508, %v1210
      %v1212 = vpop.f32.mrf.mxu0
      %v1213 = vadd.f32 %v513, %v1212
      %1214 = vmatmul.bf16.gmra.mxu0 %v908
      %v1215 = vpop.f32.mrf.mxu0
      %v1216 = vadd.f32 %v518, %v1215
      %v1217 = vpop.f32.mrf.mxu0
      %v1218 = vadd.f32 %v523, %v1217
      %1219 = vmatmul.bf16.gmra.mxu0 %v911
      %v1220 = vpop.f32.mrf.mxu0
      %v1221 = vadd.f32 %v528, %v1220
      %v1222 = vpop.f32.mrf.mxu0
      %v1223 = vadd.f32 %v533, %v1222
      %1224 = vmatmul.bf16.gmra.mxu0 %v914
      %v1225 = vpop.f32.mrf.mxu0
      %v1226 = vadd.f32 %v538, %v1225
      %v1227 = vpop.f32.mrf.mxu0
      %v1228 = vadd.f32 %v543, %v1227
      %1229 = vmatmul.bf16.gmra.mxu0 %v917
      %v1230 = vpop.f32.mrf.mxu0
      %v1231 = vadd.f32 %v548, %v1230
      %v1232 = vpop.f32.mrf.mxu0
      %v1233 = vadd.f32 %v553, %v1232
      %1234 = vmatmul.bf16.gmra.mxu0 %v920
      %v1235 = vpop.f32.mrf.mxu0
      %v1236 = vadd.f32 %v558, %v1235
      %v1237 = vpop.f32.mrf.mxu0
      %v1238 = vadd.f32 %v563, %v1237
      %1239 = vmatmul.bf16.gmra.mxu0 %v923
      %v1240 = vpop.f32.mrf.mxu0
      %v1241 = vadd.f32 %v568, %v1240
      %v1242 = vpop.f32.mrf.mxu0
      %v1243 = vadd.f32 %v573, %v1242
      %1244 = vmatmul.bf16.gmra.mxu0 %v926
      %v1245 = vpop.f32.mrf.mxu0
      %v1246 = vadd.f32 %v578, %v1245
      %v1247 = vpop.f32.mrf.mxu0
      %v1248 = vadd.f32 %v583, %v1247
      %1249 = vmatmul.bf16.gmra.mxu0 %v929
      %v1250 = vpop.f32.mrf.mxu0
      %v1251 = vadd.f32 %v588, %v1250
      %v1252 = vpop.f32.mrf.mxu0
      %v1253 = vadd.f32 %v593, %v1252
      %1254 = vmatmul.bf16.gmra.mxu0 %v932
      %v1255 = vpop.f32.mrf.mxu0
      %v1256 = vadd.f32 %v598, %v1255
      %v1257 = vpop.f32.mrf.mxu0
      %v1258 = vadd.f32 %v603, %v1257
      %1259 = vmatmul.bf16.gmra.mxu0 %v935
      %v1260 = vpop.f32.mrf.mxu0
      %v1261 = vadd.f32 %v608, %v1260
      %v1262 = vpop.f32.mrf.mxu0
      %v1263 = vadd.f32 %v613, %v1262
      %1264 = vmatmul.bf16.gmra.mxu0 %v938
      %v1265 = vpop.f32.mrf.mxu0
      %v1266 = vadd.f32 %v618, %v1265
      %v1267 = vpop.f32.mrf.mxu0
      %v1268 = vadd.f32 %v623, %v1267
      %1269 = vmatmul.bf16.gmra.mxu0 %v941
      %v1270 = vpop.f32.mrf.mxu0
      %v1271 = vadd.f32 %v628, %v1270
      %v1272 = vpop.f32.mrf.mxu0
      %v1273 = vadd.f32 %v633, %v1272
      %1274 = vmatmul.bf16.gmra.mxu0 %v944
      %v1275 = vpop.f32.mrf.mxu0
      %v1276 = vadd.f32 %v638, %v1275
      %v1277 = vpop.f32.mrf.mxu0
      %v1278 = vadd.f32 %v643, %v1277
      %1279 = vmatmul.bf16.gmra.mxu0 %v947
      %v1280 = vpop.f32.mrf.mxu0
      %v1281 = vadd.f32 %v648, %v1280
      %v1282 = vpop.f32.mrf.mxu0
      %v1283 = vadd.f32 %v653, %v1282
      %1284 = vmatmul.bf16.gmra.mxu0 %v950
      %v1285 = vpop.f32.mrf.mxu0
      %v1286 = vadd.f32 %v658, %v1285
      %v1287 = vpop.f32.mrf.mxu0
      %v1288 = vadd.f32 %v663, %v1287
      %1289 = vdwg.mxu0
      %1290 = vst [vmem:[%s208] sm:$0xff] %v962
      %1291 = vst [vmem:[%s208 + $0x8] sm:$0xff] %v1131
      %1292 = vst [vmem:[%s208 + $0x10] sm:$0xff] %v964
      %1293 = vst [vmem:[%s208 + $0x18] sm:$0xff] %v1133
      %1294 = vst [vmem:[%s208 + $0x20] sm:$0xff] %v967
      %1295 = vst [vmem:[%s208 + $0x28] sm:$0xff] %v1136
      %1296 = vst [vmem:[%s208 + $0x30] sm:$0xff] %v969
      %1297 = vst [vmem:[%s208 + $0x38] sm:$0xff] %v1138
      %1298 = vst [vmem:[%s208 + $0x40] sm:$0xff] %v972
      %1299 = vst [vmem:[%s208 + $0x48] sm:$0xff] %v1141
      %1300 = vst [vmem:[%s208 + $0x50] sm:$0xff] %v974
      %1301 = vst [vmem:[%s208 + $0x58] sm:$0xff] %v1143
      %1302 = vst [vmem:[%s208 + $0x60] sm:$0xff] %v977
      %1303 = vst [vmem:[%s208 + $0x68] sm:$0xff] %v1146
      %1304 = vst [vmem:[%s208 + $0x70] sm:$0xff] %v979
      %1305 = vst [vmem:[%s208 + $0x78] sm:$0xff] %v1148
      %1306 = vst [vmem:[%s208 + $0x80] sm:$0xff] %v982
      %1307 = vst [vmem:[%s208 + $0x88] sm:$0xff] %v1151
      %1308 = vst [vmem:[%s208 + $0x90] sm:$0xff] %v984
      %1309 = vst [vmem:[%s208 + $0x98] sm:$0xff] %v1153
      %1310 = vst [vmem:[%s208 + $0xa0] sm:$0xff] %v987
      %1311 = vst [vmem:[%s208 + $0xa8] sm:$0xff] %v1156
      %1312 = vst [vmem:[%s208 + $0xb0] sm:$0xff] %v989
      %1313 = vst [vmem:[%s208 + $0xb8] sm:$0xff] %v1158
      %1314 = vst [vmem:[%s208 + $0xc0] sm:$0xff] %v992
      %1315 = vst [vmem:[%s208 + $0xc8] sm:$0xff] %v1161
      %1316 = vst [vmem:[%s208 + $0xd0] sm:$0xff] %v994
      %1317 = vst [vmem:[%s208 + $0xd8] sm:$0xff] %v1163
      %1318 = vst [vmem:[%s208 + $0xe0] sm:$0xff] %v997
      %1319 = vst [vmem:[%s208 + $0xe8] sm:$0xff] %v1166
      %1320 = vst [vmem:[%s208 + $0xf0] sm:$0xff] %v999
      %1321 = vst [vmem:[%s208 + $0xf8] sm:$0xff] %v1168
      %1322 = vst [vmem:[%s208 + $0x100] sm:$0xff] %v1002
      %1323 = vst [vmem:[%s208 + $0x108] sm:$0xff] %v1171
      %1324 = vst [vmem:[%s208 + $0x110] sm:$0xff] %v1004
      %1325 = vst [vmem:[%s208 + $0x118] sm:$0xff] %v1173
      %1326 = vst [vmem:[%s208 + $0x120] sm:$0xff] %v1007
      %1327 = vst [vmem:[%s208 + $0x128] sm:$0xff] %v1176
      %1328 = vst [vmem:[%s208 + $0x130] sm:$0xff] %v1009
      %1329 = vst [vmem:[%s208 + $0x138] sm:$0xff] %v1178
      %1330 = vst [vmem:[%s208 + $0x140] sm:$0xff] %v1012
      %1331 = vst [vmem:[%s208 + $0x148] sm:$0xff] %v1181
      %1332 = vst [vmem:[%s208 + $0x150] sm:$0xff] %v1014
      %1333 = vst [vmem:[%s208 + $0x158] sm:$0xff] %v1183
      %1334 = vst [vmem:[%s208 + $0x160] sm:$0xff] %v1017
      %1335 = vst [vmem:[%s208 + $0x168] sm:$0xff] %v1186
      %1336 = vst [vmem:[%s208 + $0x170] sm:$0xff] %v1019
      %1337 = vst [vmem:[%s208 + $0x178] sm:$0xff] %v1188
      %1338 = vst [vmem:[%s208 + $0x180] sm:$0xff] %v1022
      %1339 = vst [vmem:[%s208 + $0x188] sm:$0xff] %v1191
      %1340 = vst [vmem:[%s208 + $0x190] sm:$0xff] %v1024
      %1341 = vst [vmem:[%s208 + $0x198] sm:$0xff] %v1193
      %1342 = vst [vmem:[%s208 + $0x1a0] sm:$0xff] %v1027
      %1343 = vst [vmem:[%s208 + $0x1a8] sm:$0xff] %v1196
      %1344 = vst [vmem:[%s208 + $0x1b0] sm:$0xff] %v1029
      %1345 = vst [vmem:[%s208 + $0x1b8] sm:$0xff] %v1198
      %1346 = vst [vmem:[%s208 + $0x1c0] sm:$0xff] %v1032
      %1347 = vst [vmem:[%s208 + $0x1c8] sm:$0xff] %v1201
      %1348 = vst [vmem:[%s208 + $0x1d0] sm:$0xff] %v1034
      %1349 = vst [vmem:[%s208 + $0x1d8] sm:$0xff] %v1203
      %1350 = vst [vmem:[%s208 + $0x1e0] sm:$0xff] %v1037
      %1351 = vst [vmem:[%s208 + $0x1e8] sm:$0xff] %v1206
      %1352 = vst [vmem:[%s208 + $0x1f0] sm:$0xff] %v1039
      %1353 = vst [vmem:[%s208 + $0x1f8] sm:$0xff] %v1208
      %1354 = vst [vmem:[%s208 + $0x200] sm:$0xff] %v1042
      %1355 = vst [vmem:[%s208 + $0x208] sm:$0xff] %v1211
      %1356 = vst [vmem:[%s208 + $0x210] sm:$0xff] %v1044
      %1357 = vst [vmem:[%s208 + $0x218] sm:$0xff] %v1213
      %1358 = vst [vmem:[%s208 + $0x220] sm:$0xff] %v1047
      %1359 = vst [vmem:[%s208 + $0x228] sm:$0xff] %v1216
      %1360 = vst [vmem:[%s208 + $0x230] sm:$0xff] %v1049
      %1361 = vst [vmem:[%s208 + $0x238] sm:$0xff] %v1218
      %1362 = vst [vmem:[%s208 + $0x240] sm:$0xff] %v1052
      %1363 = vst [vmem:[%s208 + $0x248] sm:$0xff] %v1221
      %1364 = vst [vmem:[%s208 + $0x250] sm:$0xff] %v1054
      %1365 = vst [vmem:[%s208 + $0x258] sm:$0xff] %v1223
      %1366 = vst [vmem:[%s208 + $0x260] sm:$0xff] %v1057
      %1367 = vst [vmem:[%s208 + $0x268] sm:$0xff] %v1226
      %1368 = vst [vmem:[%s208 + $0x270] sm:$0xff] %v1059
      %1369 = vst [vmem:[%s208 + $0x278] sm:$0xff] %v1228
      %1370 = vst [vmem:[%s208 + $0x280] sm:$0xff] %v1062
      %1371 = vst [vmem:[%s208 + $0x288] sm:$0xff] %v1231
      %1372 = vst [vmem:[%s208 + $0x290] sm:$0xff] %v1064
      %1373 = vst [vmem:[%s208 + $0x298] sm:$0xff] %v1233
      %1374 = vst [vmem:[%s208 + $0x2a0] sm:$0xff] %v1067
      %1375 = vst [vmem:[%s208 + $0x2a8] sm:$0xff] %v1236
      %1376 = vst [vmem:[%s208 + $0x2b0] sm:$0xff] %v1069
      %1377 = vst [vmem:[%s208 + $0x2b8] sm:$0xff] %v1238
      %1378 = vst [vmem:[%s208 + $0x2c0] sm:$0xff] %v1072
      %1379 = vst [vmem:[%s208 + $0x2c8] sm:$0xff] %v1241
      %1380 = vst [vmem:[%s208 + $0x2d0] sm:$0xff] %v1074
      %1381 = vst [vmem:[%s208 + $0x2d8] sm:$0xff] %v1243
      %1382 = vst [vmem:[%s208 + $0x2e0] sm:$0xff] %v1077
      %1383 = vst [vmem:[%s208 + $0x2e8] sm:$0xff] %v1246
      %1384 = vst [vmem:[%s208 + $0x2f0] sm:$0xff] %v1079
      %1385 = vst [vmem:[%s208 + $0x2f8] sm:$0xff] %v1248
      %1386 = vst [vmem:[%s208 + $0x300] sm:$0xff] %v1082
      %1387 = vst [vmem:[%s208 + $0x308] sm:$0xff] %v1251
      %1388 = vst [vmem:[%s208 + $0x310] sm:$0xff] %v1084
      %1389 = vst [vmem:[%s208 + $0x318] sm:$0xff] %v1253
      %1390 = vst [vmem:[%s208 + $0x320] sm:$0xff] %v1087
      %1391 = vst [vmem:[%s208 + $0x328] sm:$0xff] %v1256
      %1392 = vst [vmem:[%s208 + $0x330] sm:$0xff] %v1089
      %1393 = vst [vmem:[%s208 + $0x338] sm:$0xff] %v1258
      %1394 = vst [vmem:[%s208 + $0x340] sm:$0xff] %v1092
      %1395 = vst [vmem:[%s208 + $0x348] sm:$0xff] %v1261
      %1396 = vst [vmem:[%s208 + $0x350] sm:$0xff] %v1094
      %1397 = vst [vmem:[%s208 + $0x358] sm:$0xff] %v1263
      %1398 = vst [vmem:[%s208 + $0x360] sm:$0xff] %v1097
      %1399 = vst [vmem:[%s208 + $0x368] sm:$0xff] %v1266
      %1400 = vst [vmem:[%s208 + $0x370] sm:$0xff] %v1099
      %1401 = vst [vmem:[%s208 + $0x378] sm:$0xff] %v1268
      %1402 = vst [vmem:[%s208 + $0x380] sm:$0xff] %v1102
      %1403 = vst [vmem:[%s208 + $0x388] sm:$0xff] %v1271
      %1404 = vst [vmem:[%s208 + $0x390] sm:$0xff] %v1104
      %1405 = vst [vmem:[%s208 + $0x398] sm:$0xff] %v1273
      %1406 = vst [vmem:[%s208 + $0x3a0] sm:$0xff] %v1107
      %1407 = vst [vmem:[%s208 + $0x3a8] sm:$0xff] %v1276
      %1408 = vst [vmem:[%s208 + $0x3b0] sm:$0xff] %v1109
      %1409 = vst [vmem:[%s208 + $0x3b8] sm:$0xff] %v1278
      %1410 = vst [vmem:[%s208 + $0x3c0] sm:$0xff] %v1112
      %1411 = vst [vmem:[%s208 + $0x3c8] sm:$0xff] %v1281
      %1412 = vst [vmem:[%s208 + $0x3d0] sm:$0xff] %v1114
      %1413 = vst [vmem:[%s208 + $0x3d8] sm:$0xff] %v1283
      %1414 = vst [vmem:[%s208 + $0x3e0] sm:$0xff] %v1117
      %1415 = vst [vmem:[%s208 + $0x3e8] sm:$0xff] %v1286
      %1416 = vst [vmem:[%s208 + $0x3f0] sm:$0xff] %v1119
      %1417 = vst [vmem:[%s208 + $0x3f8] sm:$0xff] %v1288
      %s1418 = smul.u32 2, %s19
      %p1419 = scmp.lt.s32.totalorder %s18, 1
      %s1420 = scalar_select %p1419, %s18, 1
      %p1421 = scmp.lt.s32.totalorder %s1418, 1
      %s1422 = scalar_select %p1421, %s1418, 1
      %s1423 = smul.addr %s1420, 128
      %s1424 = sadd.s32 %s1422, %s1423
      %s1425 = smul.addr %s1424, 8
      %s1426 = scalar_lea.vmem %s3, %s1425
      // Predicated region
      $region33: #{fcn_backbone_forward.1} parent=31 // pred_check
        %p1427 = pneg %p116
      $region34: #{fcn_backbone_forward.1} parent=31 // pred_check_branch
        %1429 = sbr.rel (%p1427) target = $region36
      $region35: #{fcn_backbone_forward.1} parent=31 // pred_region
        %s1430 = smul.u32 2, %s19
      $region36: #{fcn_backbone_forward.1} parent=31 // pred_fallthru
        _
    $region32: #{fcn_backbone_forward.1} parent=5 // pred_fallthru
      _
    %p1431 = scmp.le.s32.totalorder 2, %s9
    // Predicated region
    $region37: #{fcn_backbone_forward.1} parent=5 // pred_check
      %p1432 = pneg %p1431
    $region38: #{fcn_backbone_forward.1} parent=5 // pred_check_branch
      %1434 = sbr.rel (%p1432) target = $region40
    $region39: #{fcn_backbone_forward.1} parent=5 // pred_region
      %s1435 = ssub.s32 %s9, 2
      // Predicated region
      $region41: #{fcn_backbone_forward.1} parent=39 // pred_check
        %p1436 = pneg %p122
      $region42: #{fcn_backbone_forward.1} parent=39 // pred_check_branch
        %1438 = sbr.rel (%p1436) target = $region44
      $region43: #{fcn_backbone_forward.1} parent=39 // pred_region
        %s1439 = smul.u32 2, %s21
        %p1440 = scmp.lt.s32.totalorder %s20, 1
        %s1441 = scalar_select %p1440, %s20, 1
        %p1442 = scmp.lt.s32.totalorder %s1439, 1
        %s1443 = scalar_select %p1442, %s1439, 1
        %s1444 = smul.addr %s1441, 128
        %s1445 = sadd.s32 %s1443, %s1444
        %s1446 = smul.addr %s1445, 8
        %s1447 = scalar_lea.vmem %s3, %s1446
      $region44: #{fcn_backbone_forward.1} parent=39 // pred_fallthru
        _
    $region40: #{fcn_backbone_forward.1} parent=5 // pred_fallthru
      _
  $region6: #{fcn_backbone_forward.1} parent=0 // loop_footer
    %s13 = sadd.s32 1, %s9
  $region7: #{fcn_backbone_forward.1} parent=0 // loop_footer_branch
    %8 = sbr.rel target = $region3
  $region8: #{fcn_backbone_forward.1} parent=0 // loop_exit
    _

</llo_original>
